<compile_context>
chip_gen: v7x
topology: tpu7x:2x2x1
jax: 0.10.0
libtpu: 0.0.40
codegen_flags: <defaults>
</compile_context>

<pallas_src>
import jax
import jax.numpy as jnp
from jax.experimental import pallas as pl
from jax.experimental.pallas import tpu as pltpu

_LANES = 128
_MIB = 1024 * 1024
_MAX_BLOCK_BYTES = 8 * _MIB  # per-buffer streaming block (review: 4-8 MiB for v7x)


def _vmem_capacity_bytes():
    """Physical VMEM per TensorCore (128 MiB on v5e/v6e, 64 MiB on v7x)."""
    try:
        cap = getattr(pltpu.get_tpu_info(), "vmem_capacity_bytes", None)
        if cap:
            return int(cap)
    except Exception:
        pass
    return 64 * _MIB  # conservative fallback = smallest generation (v7x)


def _sublane_multiple(dtype):
    """Minimum sublane tile: 8 for 32-bit, 16 for 16-bit, 32 for 8-bit dtypes."""
    bits = jnp.dtype(dtype).itemsize * 8
    if bits >= 32:
        return 8
    if bits == 16:
        return 16
    return 32


def _hardswish_kernel(beta6_ref, x_ref, o_ref):
    # beta6_ref: SMEM f32 scalar holding beta/6. x_ref/o_ref: VMEM (block_rows, 128).
    x = x_ref[...]                                  # compute natively in input dtype
    beta_over_6 = beta6_ref[0].astype(x.dtype)
    hsig = jnp.clip(x * beta_over_6 + 0.5, 0.0, 1.0)
    o_ref[...] = (x * hsig).astype(o_ref.dtype)


def _run_hardswish_2d(x2d, beta6_f32, rows, dtype):
    """Streams a lane-dense [rows, 128] slab through the elementwise kernel."""
    itemsize = jnp.dtype(dtype).itemsize
    sub = _sublane_multiple(dtype)

    # Generation-aware VMEM budget and block size.
    vmem_cap = _vmem_capacity_bytes()
    vmem_limit = min(vmem_cap * 3 // 4, 96 * _MIB)            # 48 MiB v7x, 96 MiB v5e/v6e
    target_block_bytes = min(_MAX_BLOCK_BYTES, vmem_limit // 6)  # 2 arrays x 2 bufs + slack
    target_rows = max(sub, (target_block_bytes // (_LANES * itemsize)) // sub * sub)

    if rows <= 4 * sub:
        # Tiny input (a few KiB): a single full-extent block; pipelining buys nothing.
        block_rows = rows
    else:
        # At least 4 blocks so input DMA of block i+1 overlaps output DMA of block i,
        # and the 'parallel' grid axis has >=2 steps to shard across v7x's two TCs;
        # capped at the ~8 MiB streaming block size.
        block_rows = min(target_rows, pl.cdiv(rows, 4))
        block_rows = max(sub, block_rows // sub * sub)
    grid = (pl.cdiv(rows, block_rows),)

    return pl.pallas_call(
        _hardswish_kernel,
        out_shape=jax.ShapeDtypeStruct((rows, _LANES), dtype),
        grid=grid,
        in_specs=[
            pl.BlockSpec(memory_space=pltpu.SMEM),                 # beta/6 scalar
            pl.BlockSpec((block_rows, _LANES), lambda i: (i, 0)),  # x block
        ],
        out_specs=pl.BlockSpec((block_rows, _LANES), lambda i: (i, 0)),
        compiler_params=pltpu.CompilerParams(
            dimension_semantics=("parallel",),   # shard grid steps across cores (v7x)
            vmem_limit_bytes=vmem_limit,
        ),
        cost_estimate=pl.CostEstimate(
            flops=5 * rows * _LANES,
            transcendentals=0,
            bytes_accessed=2 * rows * _LANES * itemsize),
    )(beta6_f32, x2d)


def hardswish(x, beta):
    """HardSwish(x) = x * clip(beta*x/6 + 0.5, 0, 1). Elementwise, any shape."""
    orig_shape = x.shape
    dtype = x.dtype
    n = x.size
    if n == 0:
        return x

    beta6_f32 = (jnp.asarray(beta, dtype=jnp.float32) / 6.0).reshape(1)

    # Lane-dense view: flat [rows, 128]; ravel/reshape of a contiguous array are free.
    x_flat = jnp.ravel(x)
    rem = n % _LANES
    main_n = n - rem
    rows = main_n // _LANES

    parts = []
    if rows > 0:
        x_main = x_flat[:main_n] if rem else x_flat
        out2d = _run_hardswish_2d(x_main.reshape(rows, _LANES), beta6_f32, rows, dtype)
        parts.append(out2d.reshape(-1))
    if rem:
        # <128-element tail: tiny fused jnp epilogue (no full-array pad/trim passes).
        x_tail = x_flat[main_n:]
        b = beta6_f32[0].astype(dtype)
        out_tail = x_tail * jnp.clip(x_tail * b + 0.5, 0.0, 1.0)
        parts.append(out_tail.astype(dtype))

    out_flat = parts[0] if len(parts) == 1 else jnp.concatenate(parts)
    return out_flat.reshape(orig_shape)


def hardswish_ref(x, beta):
    xf = x.astype(jnp.float32)
    y = jnp.asarray(beta, jnp.float32) * xf
    return (xf * jnp.clip(y / 6.0 + 0.5, 0.0, 1.0)).astype(x.dtype)


if __name__ == "__main__":
    key = jax.random.PRNGKey(0)

    # Deterministic parameter init matching nn.Parameter(torch.ones(()))
    beta = jnp.ones((), dtype=jnp.float32)

    # Main case: NCHW input, numel divisible by 128 -> no tail, single small block.
    x = jax.random.normal(key, (2, 4, 16, 16), dtype=jnp.float32)
    out = jax.block_until_ready(hardswish(x, beta))
    ref = hardswish_ref(x, beta)
    assert out.shape == x.shape and out.dtype == x.dtype
    assert jnp.allclose(out, ref, atol=1e-5, rtol=1e-5)

    # Multi-block path (>=4 blocks, uneven last block).
    k1, k2 = jax.random.split(key)
    x_big = jax.random.normal(k1, (5000, 128), dtype=jnp.float32)
    out_big = jax.block_until_ready(hardswish(x_big, beta))
    assert jnp.allclose(out_big, hardswish_ref(x_big, beta), atol=1e-5, rtol=1e-5)

    # Ragged-size path (numel % 128 != 0 -> 128-aligned prefix kernel + jnp tail).
    x_rag = jax.random.normal(k2, (7, 11, 13), dtype=jnp.float32)
    out_rag = jax.block_until_ready(hardswish(x_rag, beta))
    assert jnp.allclose(out_rag, hardswish_ref(x_rag, beta), atol=1e-5, rtol=1e-5)

    print("KERNEL_OK")
</pallas_src>

<mosaic_0001>
module attributes {stable_mosaic.version = 11 : i64} {
  func.func @_hardswish_kernel(%arg0: i32, %arg1: memref<1xf32, #tpu.memory_space<smem>>, %arg2: memref<16x128xf32, #tpu.memory_space<vmem>>, %arg3: memref<16x128xf32, #tpu.memory_space<vmem>>) attributes {dimension_semantics = [#tpu.dimension_semantics<parallel>], iteration_bounds = array<i64: 1>, scalar_prefetch = 0 : i64, scratch_operands = 0 : i64, tpu.core_type = #tpu.core_type<tc>, window_params = [{transform_indices = @transform_0, window_bounds = array<i64: 1>}, {transform_indices = @transform_1, window_bounds = array<i64: 16, 128>}, {transform_indices = @transform_2, window_bounds = array<i64: 16, 128>}]} {
    %c0 = arith.constant 0 : index
    %c0_0 = arith.constant 0 : index
    %0 = vector.load %arg2[%c0, %c0_0] : memref<16x128xf32, #tpu.memory_space<vmem>>, vector<16x128xf32>
    %c0_1 = arith.constant 0 : index
    %1 = memref.load %arg1[%c0_1] : memref<1xf32, #tpu.memory_space<smem>>
    %2 = vector.broadcast %1 : f32 to vector<16x128xf32>
    %3 = arith.mulf %0, %2 : vector<16x128xf32>
    %cst = arith.constant 5.000000e-01 : f32
    %4 = vector.broadcast %cst : f32 to vector<16x128xf32>
    %5 = arith.addf %3, %4 : vector<16x128xf32>
    %cst_2 = arith.constant 0.000000e+00 : f32
    %cst_3 = arith.constant 1.000000e+00 : f32
    %6 = vector.broadcast %cst_2 : f32 to vector<16x128xf32>
    %7 = arith.maximumf %6, %5 : vector<16x128xf32>
    %8 = vector.broadcast %cst_3 : f32 to vector<16x128xf32>
    %9 = arith.minimumf %8, %7 : vector<16x128xf32>
    %10 = arith.mulf %0, %9 : vector<16x128xf32>
    %c0_4 = arith.constant 0 : index
    %c0_5 = arith.constant 0 : index
    %11 = vector.load %arg3[%c0_4, %c0_5] : memref<16x128xf32, #tpu.memory_space<vmem>>, vector<16x128xf32>
    tpu.vector_store %arg3[%c0_4, %c0_5], %10 {strides = array<i32>} : memref<16x128xf32, #tpu.memory_space<vmem>>, vector<16x128xf32>,
    return
  }
  func.func @transform_0(%arg0: i32) -> i32 {
    %c0_i32 = arith.constant 0 : i32
    %c0_i32_0 = arith.constant 0 : i32
    return %c0_i32 : i32
  }
  func.func @transform_1(%arg0: i32) -> (i32, i32) {
    %c0_i32 = arith.constant 0 : i32
    %c0_i32_0 = arith.constant 0 : i32
    return %arg0, %c0_i32 : i32, i32
  }
  func.func @transform_2(%arg0: i32) -> (i32, i32) {
    %c0_i32 = arith.constant 0 : i32
    %c0_i32_0 = arith.constant 0 : i32
    return %arg0, %c0_i32 : i32, i32
  }
}

</mosaic_0001>

<llo_original>
// kernel: tpu_custom_call.1
$region0: #{tpu_custom_call.1}
  #allocation0 [shape = 'u32[]', space=smem, size = 0x4, offset = 0x4, fixed_abs, tag = 'smem constant byte address 0x4 - core index']
  #allocation1 [shape = 'u32[144,128]{1,0:T(1,128)}', space=vmem, size = 0x12000, scoped, tag = 'internal scratch']
  #allocation2 [shape = 'f32[1]{0:T(128)S(6)}', space=smem, size = 0x200, scoped, tag = 'scoped memory for tpu_custom_call.1']
  %s0 = inlined_call_operand.<no memory space> [shape: f32[1], index: 0, kind: input, shape index: {}]
  %s1 = inlined_call_operand.hbm [shape: f32[16,128], index: 1, kind: input, shape index: {}]
  %s2 = inlined_call_operand.hbm [shape: f32[16,128], index: 2, kind: output, shape index: {}]
  %s3 = sld [smem:[#allocation0]]
  $region22: #{tpu_custom_call.1} parent=0
    _
  %s5 = ssub.s32 1, %s3
  %s6 = scalar_select 0, %s5, %s3
  %7 = sst [smem:[#allocation2]] %s0
  $region1: #{tpu_custom_call.1} parent=0
    #allocation3 [shape = 'u8[8192]{0}', space=vmem, size = 0x2000, scoped, tag = 'input window, operand 1, single buffered']
    #allocation4 [shape = 's32[1]{0}', space=sflag, size = 0x4, scoped, tag = 'scoped memory for tpu_custom_call.1']
    #allocation5 [shape = 's32[1]{0}', space=sflag, size = 0x4, scoped, tag = 'scoped memory for tpu_custom_call.1']
    #allocation6 [shape = 'u8[8192]{0}', space=vmem, size = 0x2000, scoped, tag = 'output window, operand 0, single buffered']
    %8 = vsyncpa [#allocation4], 0
    %9 = vsyncpa [#allocation5], 0
    // Predicated region
    $region2: #{tpu_custom_call.1} parent=1 // pred_check
      _
    $region3: #{tpu_custom_call.1} parent=1 // pred_check_branch
      %11 = sbr.rel (0) target = $region5
    $region4: #{tpu_custom_call.1} parent=1 // pred_region
      _
    $region5: #{tpu_custom_call.1} parent=1 // pred_fallthru
      _
    // Predicated region
    $region6: #{tpu_custom_call.1} parent=1 // pred_check
      _
    $region7: #{tpu_custom_call.1} parent=1 // pred_check_branch
      %13 = sbr.rel (0) target = $region9
    $region8: #{tpu_custom_call.1} parent=1 // pred_region
      %s15 = ssub.s32 256, 256
      %16 = vsyncadd [#allocation4], %s15
      %s17 = sshll.u32 [#allocation3], 4
      %s18 = int_to_ptr.vmem [resolvable:$true] %s17
      %23 = dma.hbm_to_vmem [thread:$0]  %s1, 256, %s18, [#allocation4], 128, 128, 8
    $region9: #{tpu_custom_call.1} parent=1 // pred_fallthru
      _
    // Predicated region
    $region10: #{tpu_custom_call.1} parent=1 // pred_check
      _
    $region11: #{tpu_custom_call.1} parent=1 // pred_check_branch
      %25 = sbr.rel (0) target = $region13
    $region12: #{tpu_custom_call.1} parent=1 // pred_region
      %26 = dma.done [#allocation4], 256
    $region13: #{tpu_custom_call.1} parent=1 // pred_fallthru
      _
    %v27 = vld [vmem:[#allocation3] sm:$0xff]
    %v28 = vld [vmem:[#allocation3 + $0x8] sm:$0xff]
    %s29 = sld [smem:[#allocation2]]
    %v30 = vstv %s29
    %v31 = vmul.f32 %v27, %v30
    %v32 = vmul.f32 %v28, %v30
    %v33 = vadd.f32 %v31, 0.5
    %v34 = vadd.f32 %v32, 0.5
    %v35 = vmax.f32 %v33, 0.0
    %v36 = vmax.f32 %v34, 0.0
    %v37 = vmin.f32 %v35, 1.0
    %v38 = vmin.f32 %v36, 1.0
    %v39 = vmul.f32 %v27, %v37
    %v40 = vmul.f32 %v28, %v38
    %41 = vst [vmem:[#allocation6] sm:$0xff] %v39
    %42 = vst [vmem:[#allocation6 + $0x8] sm:$0xff] %v40
    // Predicated region
    $region14: #{tpu_custom_call.1} parent=1 // pred_check
      _
    $region15: #{tpu_custom_call.1} parent=1 // pred_check_branch
      %44 = sbr.rel (0) target = $region17
    $region16: #{tpu_custom_call.1} parent=1 // pred_region
      %s46 = ssub.s32 256, 256
      %47 = vsyncadd [#allocation5], %s46
      %s48 = sshll.u32 [#allocation6], 4
      %s49 = int_to_ptr.vmem [resolvable:$true] %s48
      %54 = dma.vmem_to_hbm [thread:$0]  %s49, 256, %s2, [#allocation5], 128, 128, 8
    $region17: #{tpu_custom_call.1} parent=1 // pred_fallthru
      _
    // Predicated region
    $region18: #{tpu_custom_call.1} parent=1 // pred_check
      _
    $region19: #{tpu_custom_call.1} parent=1 // pred_check_branch
      %56 = sbr.rel (0) target = $region21
    $region20: #{tpu_custom_call.1} parent=1 // pred_region
      %57 = dma.done [#allocation5], 256
    $region21: #{tpu_custom_call.1} parent=1 // pred_fallthru
      _
    %58 = vsyncpa [#allocation4], 1
    %59 = vsyncpa [#allocation5], 1

</llo_original>
